<compile_context>
chip_gen: v7x
topology: tpu7x:2x2x1
jax: 0.10.0
libtpu: 0.0.40
codegen_flags: <defaults>
</compile_context>

<pallas_src>
import functools
import math

import jax
import jax.numpy as jnp
from jax.experimental import pallas as pl
from jax.experimental.pallas import tpu as pltpu


# ----------------------------------------------------------------------------
# Tiling configuration
# ----------------------------------------------------------------------------
# Row tiles (all multiples of 8). Sized for v7x's 64 MiB VMEM with headroom;
# on v6e (128 MiB) these can be raised (attention 512, mlp 2048-4096).
_ATTN_ROW_TILE = 256
_MLP_ROW_TILE = 1024
_COATTN_ROW_TILE = 256
_VMEM_LIMIT_BYTES = 48 * 1024 * 1024


def _round_up(x, m):
    return ((x + m - 1) // m) * m


def _pad_rows(x, m_pad):
    m = x.shape[0]
    if m_pad == m:
        return x
    pad = [(0, m_pad - m)] + [(0, 0)] * (x.ndim - 1)
    return jnp.pad(x, pad)


def _full_spec(shape):
    nd = len(shape)
    return pl.BlockSpec(shape, lambda i, nd=nd: (0,) * nd)


def _row_tiling(m, tile):
    tm = min(tile, _round_up(m, 8))
    m_pad = _round_up(m, tm)
    return tm, m_pad


# ----------------------------------------------------------------------------
# Pallas kernels
# ----------------------------------------------------------------------------
def _mlp2_kernel(x_ref, w1_ref, b1_ref, w2_ref, b2_ref, o_ref):
    # y = relu(x @ w1 + b1) @ w2 + b2 ; bf16 matmul operands, f32 accumulation.
    x = x_ref[...].astype(jnp.bfloat16)
    h = jnp.dot(x, w1_ref[...], preferred_element_type=jnp.float32) + b1_ref[...]
    h = jnp.maximum(h, 0.0).astype(jnp.bfloat16)
    y = jnp.dot(h, w2_ref[...], preferred_element_type=jnp.float32) + b2_ref[...]
    o_ref[...] = y.astype(o_ref.dtype)


def mlp2(x, w1, b1, w2, b2, *, tile_rows=_MLP_ROW_TILE, out_dtype=jnp.bfloat16):
    """Row-tiled 2-layer MLP. x [M, din] -> [M, dout]."""
    m, din = x.shape
    dout = w2.shape[1]
    tm, m_pad = _row_tiling(m, tile_rows)
    xp = _pad_rows(x, m_pad)
    out = pl.pallas_call(
        _mlp2_kernel,
        grid=(m_pad // tm,),
        in_specs=[pl.BlockSpec((tm, din), lambda i: (i, 0)),
                  _full_spec(w1.shape), _full_spec(b1.shape),
                  _full_spec(w2.shape), _full_spec(b2.shape)],
        out_specs=pl.BlockSpec((tm, dout), lambda i: (i, 0)),
        out_shape=jax.ShapeDtypeStruct((m_pad, dout), out_dtype),
        compiler_params=pltpu.CompilerParams(
            dimension_semantics=("parallel",),
            vmem_limit_bytes=_VMEM_LIMIT_BYTES),
    )(xp, w1, b1, w2, b2)
    return out[:m]


def _temporal_attn_kernel(src_ref, nbr_ref, edge_ref, dtk_ref,
                          tw_ref, tb_ref, qtb_ref,
                          wq_ref, wk_ref, wv_ref,
                          wm1a_ref, wm1s_ref, bm1_ref, wm2_ref, bm2_ref,
                          o_ref, *, n_heads):
    f32 = jnp.float32
    bf16 = jnp.bfloat16
    TM, N, D = nbr_ref.shape
    dh = D // n_heads
    scale = 1.0 / math.sqrt(dh)

    # Key time-encoding (f32 on VPU/EUP), then bf16 for the MXU.
    dtk = dtk_ref[...]                                    # (TM, N) f32
    tw = tw_ref[...].reshape(1, 1, D)
    tb = tb_ref[...].reshape(1, 1, D)
    te_k = jnp.cos(dtk[:, :, None] * tw + tb)             # (TM, N, D) f32

    nbr = nbr_ref[...]                                    # (TM, N, D) bf16
    edg = edge_ref[...]                                   # (TM, N, D) bf16
    src = src_ref[...]                                    # (TM, D)    bf16

    # Fused K/V projections: one (TM*N, 3D) x (3D, D) matmul each.
    kv_in = jnp.concatenate([nbr, edg, te_k.astype(bf16)], axis=-1)
    kv_in = kv_in.reshape(TM * N, 3 * D)
    k = jnp.dot(kv_in, wk_ref[...], preferred_element_type=f32)   # (TM*N, D)
    v = jnp.dot(kv_in, wv_ref[...], preferred_element_type=f32)   # (TM*N, D)
    # Query: src projection + constant (dt_q == 0) time-encoding bias.
    q = jnp.dot(src, wq_ref[...], preferred_element_type=f32) + qtb_ref[...]   # (TM, D)

    k3 = k.reshape(TM, N, D).astype(bf16)
    v3 = v.reshape(TM, N, D).astype(bf16)

    # Per-head attention: each head contracts only its dh lanes.
    heads = []
    for h in range(n_heads):
        lo = h * dh
        q_h = q[:, lo:lo + dh].astype(bf16).reshape(TM, 1, dh)     # (TM, 1, dh)
        k_h = k3[:, :, lo:lo + dh]                                  # (TM, N, dh)
        v_h = v3[:, :, lo:lo + dh]
        s = jax.lax.dot_general(q_h, k_h, (((2,), (2,)), ((0,), (0,))),
                                preferred_element_type=f32) * scale         # (TM, 1, N)
        s = s - jnp.max(s, axis=-1, keepdims=True)
        p = jnp.exp(s)
        p = p * pl.reciprocal(jnp.sum(p, axis=-1, keepdims=True), approx=True)
        o_h = jax.lax.dot_general(p.astype(bf16), v_h,
                                  (((2,), (1,)), ((0,), (0,))),
                                  preferred_element_type=f32)                # (TM, 1, dh)
        heads.append(o_h.reshape(TM, dh))
    attn = jnp.concatenate(heads, axis=-1)                                   # (TM, D)

    # Merge MLP (matmuls hoisted out of the head loop).
    h1 = (jnp.dot(attn.astype(bf16), wm1a_ref[...], preferred_element_type=f32)
          + jnp.dot(src, wm1s_ref[...], preferred_element_type=f32)
          + bm1_ref[...])
    h1 = jnp.maximum(h1, 0.0).astype(bf16)
    o_ref[...] = jnp.dot(h1, wm2_ref[...], preferred_element_type=f32) + bm2_ref[...]


def temporal_attention(src_feat, nbr_feat, edge_feat, dt_k, params, n_heads,
                       tile_rows=_ATTN_ROW_TILE):
    """src_feat [M,D], nbr_feat/edge_feat [M,N,D], dt_k [M,N] -> [M,D] (f32)."""
    M, D = src_feat.shape
    N = nbr_feat.shape[1]
    tm, m_pad = _row_tiling(M, tile_rows)
    src = _pad_rows(src_feat.astype(jnp.bfloat16), m_pad)
    nbr = _pad_rows(nbr_feat.astype(jnp.bfloat16), m_pad)
    edg = _pad_rows(edge_feat.astype(jnp.bfloat16), m_pad)
    dtk = _pad_rows(dt_k.astype(jnp.float32), m_pad)
    kernel = functools.partial(_temporal_attn_kernel, n_heads=n_heads)
    data_specs = [
        pl.BlockSpec((tm, D), lambda i: (i, 0)),       # src features
        pl.BlockSpec((tm, N, D), lambda i: (i, 0, 0)),  # neighbor features
        pl.BlockSpec((tm, N, D), lambda i: (i, 0, 0)),  # edge features
        pl.BlockSpec((tm, N), lambda i: (i, 0)),        # key delta-times
    ]
    w_specs = [_full_spec(p.shape) for p in params]
    out = pl.pallas_call(
        kernel,
        grid=(m_pad // tm,),
        in_specs=data_specs + w_specs,
        out_specs=pl.BlockSpec((tm, D), lambda i: (i, 0)),
        out_shape=jax.ShapeDtypeStruct((m_pad, D), jnp.float32),
        compiler_params=pltpu.CompilerParams(
            dimension_semantics=("parallel",),
            vmem_limit_bytes=_VMEM_LIMIT_BYTES),
    )(src, nbr, edg, dtk, *params)
    return out[:M]


def _coattn_kernel(q_ref, klist_ref, wc_ref, o_ref):
    f32 = jnp.float32
    bf16 = jnp.bfloat16
    TB, N1, D = klist_ref.shape
    q = q_ref[...].astype(bf16)                                               # (TB, D)
    K = klist_ref[...].astype(bf16)                                           # (TB, N1, D)
    qw = jnp.dot(q, wc_ref[...], preferred_element_type=f32)                  # (TB, D)
    qw3 = qw.astype(bf16).reshape(TB, 1, D)
    s = jax.lax.dot_general(qw3, K, (((2,), (2,)), ((0,), (0,))),
                            preferred_element_type=f32) / math.sqrt(D)        # (TB, 1, N1)
    s = s - jnp.max(s, axis=-1, keepdims=True)
    p = jnp.exp(s)
    p = p * pl.reciprocal(jnp.sum(p, axis=-1, keepdims=True), approx=True)
    out = jax.lax.dot_general(p.astype(bf16), K, (((2,), (1,)), ((0,), (0,))),
                              preferred_element_type=f32)                     # (TB, 1, D)
    o_ref[...] = out.reshape(TB, D)


def coattention(q, klist, wc, tile_rows=_COATTN_ROW_TILE):
    """q [B,D], klist [B,N1,D] -> [B,D] (batched over all rows, row-tiled grid)."""
    B, D = q.shape
    N1 = klist.shape[1]
    tb_, b_pad = _row_tiling(B, tile_rows)
    qp = _pad_rows(q, b_pad)
    kp = _pad_rows(klist, b_pad)
    out = pl.pallas_call(
        _coattn_kernel,
        grid=(b_pad // tb_,),
        in_specs=[pl.BlockSpec((tb_, D), lambda i: (i, 0)),
                  pl.BlockSpec((tb_, N1, D), lambda i: (i, 0, 0)),
                  _full_spec(wc.shape)],
        out_specs=pl.BlockSpec((tb_, D), lambda i: (i, 0)),
        out_shape=jax.ShapeDtypeStruct((b_pad, D), jnp.float32),
        compiler_params=pltpu.CompilerParams(
            dimension_semantics=("parallel",),
            vmem_limit_bytes=_VMEM_LIMIT_BYTES),
    )(qp, kp, wc)
    return out[:B]


# ----------------------------------------------------------------------------
# Model
# ----------------------------------------------------------------------------
def _init_linear(key, fan_in, fan_out):
    lim = 1.0 / math.sqrt(fan_in)
    return jax.random.uniform(key, (fan_in, fan_out), jnp.float32, -lim, lim)


class TGNPallas:
    def __init__(self, config, node_features_init, edge_initial_feat_dict,
                 neighbors=20, n_layers=2, n_heads=2, dropout=0.2, dimension=128):
        self.cfg = config
        self.node_features_init = jnp.asarray(node_features_init, jnp.float32)
        self.edge_initial_feat_dict = jnp.asarray(edge_initial_feat_dict, jnp.float32)
        self.dims = dimension
        self.neighbors_num = neighbors
        self.n_layers = n_layers
        self.n_heads = n_heads
        self.min_timestamp = jnp.float32(config['min_timestamp'])
        # TODO(synk): dropout is eval-mode identity; MergeLayer_output (affinity_score) is unused in forward.

        D = dimension
        assert D % n_heads == 0
        node_in = config['node_initial_dims']
        edge_in = config['edge_initial_dims']
        org_e = config['org_edge_feat_dim']
        bf16 = jnp.bfloat16

        ks = iter(jax.random.split(jax.random.PRNGKey(42), 64))
        lin = lambda fi, fo: _init_linear(next(ks), fi, fo)
        bias = lambda fo: jnp.zeros((1, fo), jnp.float32)

        # Node_feat_process / Edge_feat_process / Edge_feat_process(concat): 2-layer MLPs.
        # Weights stored bf16 (MXU operands), biases f32.
        self.node_mlp = (lin(node_in, D).astype(bf16), bias(D), lin(D, D).astype(bf16), bias(D))
        self.edge_mlp = (lin(edge_in, D).astype(bf16), bias(D), lin(D, D).astype(bf16), bias(D))
        self.edge_cat_mlp = (lin(D + org_e, D).astype(bf16), bias(D), lin(D, D).astype(bf16), bias(D))

        # TimeEncode: te(dt) = cos(dt * w + b) with deterministic log-spaced frequencies.
        tw = (1.0 / (10.0 ** jnp.linspace(0.0, 4.0, D))).reshape(1, D).astype(jnp.float32)
        tb = jnp.zeros((1, D), jnp.float32)

        # One temporal-attention parameter set per layer. K/V projections pre-stacked
        # into (3D, D); the query time-encoding (dt_q == 0) is folded into a constant bias.
        self.attn_params = []
        for _ in range(n_layers):
            wqf, wqt = lin(D, D), lin(D, D)
            wkn, wke, wkt = lin(D, D), lin(D, D), lin(D, D)
            wvn, wve, wvt = lin(D, D), lin(D, D), lin(D, D)
            qtb = jnp.dot(jnp.cos(tb), wqt)                       # (1, D) f32, constant
            wk_stack = jnp.concatenate([wkn, wke, wkt], axis=0).astype(bf16)   # (3D, D)
            wv_stack = jnp.concatenate([wvn, wve, wvt], axis=0).astype(bf16)   # (3D, D)
            self.attn_params.append((
                tw, tb, qtb,
                wqf.astype(bf16),                 # Wq (node part)
                wk_stack, wv_stack,               # fused Wk, Wv
                lin(D, D).astype(bf16),           # merge layer1, attention part
                lin(D, D).astype(bf16),           # merge layer1, source part
                bias(D),                          # merge layer1 bias
                lin(D, D).astype(bf16), bias(D),  # merge layer2
            ))
        self.wc = lin(D, D).astype(bf16)          # co-attention bilinear weight

    # ------------------------------------------------------------------
    def _edge_features(self, hop1_org, hop2_org):
        """hop1_org [Bm,N,1+org_e], hop2_org [Bm,N*N,1+org_e] -> merged [Bm*N + Bm*N*N, D]."""
        rows1 = hop1_org.shape[0] * hop1_org.shape[1]
        rows2 = hop2_org.shape[0] * hop2_org.shape[1]
        org = jnp.concatenate([hop1_org.reshape(rows1, -1),
                               hop2_org.reshape(rows2, -1)], axis=0)
        eidx = org[:, 0].astype(jnp.int32)
        e_raw = self.edge_initial_feat_dict[eidx]                        # [rows, edge_init]
        e_feat = mlp2(e_raw, *self.edge_mlp)                             # [rows, D] bf16
        e_cat = jnp.concatenate([e_feat, org[:, 1:].astype(jnp.bfloat16)], axis=-1)
        return mlp2(e_cat, *self.edge_cat_mlp)                           # [rows, D] bf16

    def compute_temporal_embeddings(self, node_id, graphfeature, timestamps,
                                    hop1_edge_orgfeature, hop2_edge_orgfeature):
        N, D = self.neighbors_num, self.dims
        Bm = node_id.shape[0]
        timestamps = jnp.maximum(0.0, timestamps - self.min_timestamp)

        idx = 1
        n1_node = graphfeature[:, idx:idx + N].astype(jnp.int32); idx += N
        n2_node = graphfeature[:, idx:idx + N * N].astype(jnp.int32); idx += N * N
        idx += N          # 1-hop edge indices (computed but unused in the reference)
        idx += N * N      # 2-hop edge indices (computed but unused in the reference)
        n1_time = jnp.maximum(0.0, graphfeature[:, idx:idx + N] - self.min_timestamp); idx += N
        n2_time = jnp.maximum(0.0, graphfeature[:, idx:idx + N * N] - self.min_timestamp)

        # Node features: single gather + single node MLP for src + 1-hop + 2-hop rows.
        # TODO(synk): deduplicating repeated n2 node ids (data-dependent unique) is left to XLA.
        all_nodes = jnp.concatenate([node_id.astype(jnp.int32),
                                     n1_node.reshape(-1), n2_node.reshape(-1)], axis=0)
        all_feat = mlp2(self.node_features_init[all_nodes], *self.node_mlp)     # [*, D] bf16
        src_feat = all_feat[:Bm]
        n1_feat = all_feat[Bm:Bm + Bm * N]
        n2_feat = all_feat[Bm + Bm * N:]

        # Edge features: hop1 + hop2 rows merged through both edge MLPs.
        e_all = self._edge_features(hop1_edge_orgfeature, hop2_edge_orgfeature)
        e1_feat = e_all[:Bm * N].reshape(Bm, N, D)
        e2_feat = e_all[Bm * N:].reshape(Bm, N * N, D)

        # layer 1: embed each 1-hop neighbor from its 2-hop neighborhood
        q1 = n1_feat                                                    # [Bm*N, D]
        k1_nbr = n2_feat.reshape(Bm * N, N, D)
        k1_edge = e2_feat.reshape(Bm * N, N, D)
        dt_k1 = (n1_time.reshape(Bm, N, 1) - n2_time.reshape(Bm, N, N)).reshape(Bm * N, N)
        h1 = temporal_attention(q1, k1_nbr, k1_edge, dt_k1,
                                self.attn_params[0], self.n_heads)      # [Bm*N, D] f32

        # layer 2: source node over its 1-hop neighbors (layer-1 embeddings)
        # TODO(synk): query delta-t is 0 in both layers (as in the original); padded/empty
        #             neighbor slots are not masked (matching the reference behaviour).
        k2_nbr = h1.reshape(Bm, N, D)
        dt_k2 = timestamps.reshape(Bm, 1) - n1_time                     # [Bm, N]
        src_emb = temporal_attention(src_feat, k2_nbr, e1_feat, dt_k2,
                                     self.attn_params[1], self.n_heads)  # [Bm, D] f32

        # embedding list: [source, 1-hop neighbor embeddings]  ->  [Bm, N+1, D]
        return jnp.concatenate([src_emb[:, None, :], k2_nbr], axis=1)

    # ------------------------------------------------------------------
    def forward(self, sources, destinations, user_graphfeat_initial, oppo_grapgfeat_initial,
                user_1hop_edge_orgfeature, user_2hop_edge_orgfeature,
                oppo_1hop_edge_orgfeature, oppo_2hop_edge_orgfeature):
        N = self.neighbors_num
        B = sources.shape[0]
        t_cols = N * N + N
        sources_max_time = jnp.max(user_graphfeat_initial[:, -t_cols:], axis=1)
        dest_max_time = jnp.max(oppo_grapgfeat_initial[:, -t_cols:], axis=1)

        # Merge source and destination branches: identical weights, 2x rows per kernel
        # launch, half the weight DMAs.
        node_id = jnp.concatenate([sources, destinations], axis=0)
        gf = jnp.concatenate([user_graphfeat_initial, oppo_grapgfeat_initial], axis=0)
        ts = jnp.concatenate([sources_max_time, dest_max_time], axis=0)
        e1 = jnp.concatenate([user_1hop_edge_orgfeature, oppo_1hop_edge_orgfeature], axis=0)
        e2 = jnp.concatenate([user_2hop_edge_orgfeature, oppo_2hop_edge_orgfeature], axis=0)

        emb_list = self.compute_temporal_embeddings(node_id, gf, ts, e1, e2)   # [2B, N+1, D]
        source_list = emb_list[:B]
        dest_list = emb_list[B:]

        source_node_embedding = source_list[:, 0, :]
        dest_node_embedding = dest_list[:, 0, :]
        coattention_source = coattention(source_node_embedding, dest_list, self.wc)
        coattention_dest = coattention(dest_node_embedding, source_list, self.wc)
        return (source_node_embedding, dest_node_embedding,
                coattention_source, coattention_dest,
                sources_max_time, dest_max_time)


# ----------------------------------------------------------------------------
# Example run
# ----------------------------------------------------------------------------
if __name__ == "__main__":
    B, N, D = 2, 4, 32
    num_nodes, num_edge_types = 50, 10
    node_in, edge_in, org_e = 16, 8, 3
    config = dict(node_initial_dims=node_in, edge_initial_dims=edge_in,
                  org_edge_feat_dim=org_e, min_timestamp=5.0)

    key = jax.random.PRNGKey(0)
    keys = jax.random.split(key, 16)
    node_feats = jax.random.normal(keys[0], (num_nodes, node_in), jnp.float32)
    edge_dict = jax.random.normal(keys[1], (num_edge_types, edge_in), jnp.float32)

    model = TGNPallas(config, node_feats, edge_dict,
                      neighbors=N, n_layers=2, n_heads=2, dropout=0.2, dimension=D)

    sources = jax.random.randint(keys[2], (B,), 0, num_nodes)
    destinations = jax.random.randint(keys[3], (B,), 0, num_nodes)

    def make_graphfeat(k):
        ks = jax.random.split(k, 7)
        first = jax.random.randint(ks[0], (B, 1), 0, num_nodes).astype(jnp.float32)
        n1 = jax.random.randint(ks[1], (B, N), 0, num_nodes).astype(jnp.float32)
        n2 = jax.random.randint(ks[2], (B, N * N), 0, num_nodes).astype(jnp.float32)
        e1 = jax.random.randint(ks[3], (B, N), 0, 1000).astype(jnp.float32)
        e2 = jax.random.randint(ks[4], (B, N * N), 0, 1000).astype(jnp.float32)
        t1 = jax.random.uniform(ks[5], (B, N), jnp.float32, 0.0, 20.0)
        t2 = jax.random.uniform(ks[6], (B, N * N), jnp.float32, 0.0, 20.0)
        return jnp.concatenate([first, n1, n2, e1, e2, t1, t2], axis=1)  # [B, 1 + 3N + 3N^2]

    def make_edge_org(k, rows):
        k1, k2 = jax.random.split(k)
        eidx = jax.random.randint(k1, (B, rows, 1), 0, num_edge_types).astype(jnp.float32)
        feats = jax.random.uniform(k2, (B, rows, org_e), jnp.float32)
        return jnp.concatenate([eidx, feats], axis=-1)                   # [B, rows, 1 + org_e]

    user_gf = make_graphfeat(keys[4])
    oppo_gf = make_graphfeat(keys[5])
    u1e = make_edge_org(keys[6], N)
    u2e = make_edge_org(keys[7], N * N)
    o1e = make_edge_org(keys[8], N)
    o2e = make_edge_org(keys[9], N * N)

    outs = model.forward(sources, destinations, user_gf, oppo_gf, u1e, u2e, o1e, o2e)
    for o in outs:
        jax.block_until_ready(o)
    assert outs[0].shape == (B, D) and outs[1].shape == (B, D)
    assert outs[2].shape == (B, D) and outs[3].shape == (B, D)
    assert outs[4].shape == (B,) and outs[5].shape == (B,)
    print("KERNEL_OK")
</pallas_src>

<mosaic_0001>
module attributes {stable_mosaic.version = 11 : i64} {
  func.func @_mlp2_kernel(%arg0: i32, %arg1: memref<88x16xf32, #tpu.memory_space<vmem>>, %arg2: memref<16x32xbf16, #tpu.memory_space<vmem>>, %arg3: memref<1x32xf32, #tpu.memory_space<vmem>>, %arg4: memref<32x32xbf16, #tpu.memory_space<vmem>>, %arg5: memref<1x32xf32, #tpu.memory_space<vmem>>, %arg6: memref<88x32xbf16, #tpu.memory_space<vmem>>) attributes {dimension_semantics = [#tpu.dimension_semantics<parallel>], iteration_bounds = array<i64: 1>, scalar_prefetch = 0 : i64, scratch_operands = 0 : i64, tpu.core_type = #tpu.core_type<tc>, window_params = [{transform_indices = @transform_0, window_bounds = array<i64: 88, 16>}, {pipeline_mode = #tpu.pipeline_mode<synchronous>, transform_indices = @transform_1, window_bounds = array<i64: 16, 32>}, {pipeline_mode = #tpu.pipeline_mode<synchronous>, transform_indices = @transform_2, window_bounds = array<i64: 1, 32>}, {pipeline_mode = #tpu.pipeline_mode<synchronous>, transform_indices = @transform_3, window_bounds = array<i64: 32, 32>}, {pipeline_mode = #tpu.pipeline_mode<synchronous>, transform_indices = @transform_4, window_bounds = array<i64: 1, 32>}, {transform_indices = @transform_5, window_bounds = array<i64: 88, 32>}]} {
    %c0 = arith.constant 0 : index
    %c0_0 = arith.constant 0 : index
    %0 = vector.load %arg1[%c0, %c0_0] : memref<88x16xf32, #tpu.memory_space<vmem>>, vector<88x16xf32>
    %1 = arith.truncf %0 : vector<88x16xf32> to vector<88x16xbf16>
    %c0_1 = arith.constant 0 : index
    %c0_2 = arith.constant 0 : index
    %2 = vector.load %arg2[%c0_1, %c0_2] : memref<16x32xbf16, #tpu.memory_space<vmem>>, vector<16x32xbf16>
    %cst = arith.constant dense<0.000000e+00> : vector<88x32xf32>
    %3 = tpu.matmul %1, %2, %cst {dimension_numbers = #tpu.dot_dimension_numbers<[1], [0], [0], [1], [0, 0, 1, 1], [], []>} : vector<88x16xbf16>, vector<16x32xbf16>, vector<88x32xf32> -> vector<88x32xf32>
    %c0_3 = arith.constant 0 : index
    %c0_4 = arith.constant 0 : index
    %4 = vector.load %arg3[%c0_3, %c0_4] : memref<1x32xf32, #tpu.memory_space<vmem>>, vector<1x32xf32>
    %5 = vector.broadcast %4 : vector<1x32xf32> to vector<88x32xf32>
    %6 = arith.addf %3, %5 : vector<88x32xf32>
    %cst_5 = arith.constant 0.000000e+00 : f32
    %7 = vector.broadcast %cst_5 : f32 to vector<88x32xf32>
    %8 = arith.maximumf %6, %7 : vector<88x32xf32>
    %9 = arith.truncf %8 : vector<88x32xf32> to vector<88x32xbf16>
    %c0_6 = arith.constant 0 : index
    %c0_7 = arith.constant 0 : index
    %10 = vector.load %arg4[%c0_6, %c0_7] : memref<32x32xbf16, #tpu.memory_space<vmem>>, vector<32x32xbf16>
    %cst_8 = arith.constant dense<0.000000e+00> : vector<88x32xf32>
    %11 = tpu.matmul %9, %10, %cst_8 {dimension_numbers = #tpu.dot_dimension_numbers<[1], [0], [0], [1], [0, 0, 1, 1], [], []>} : vector<88x32xbf16>, vector<32x32xbf16>, vector<88x32xf32> -> vector<88x32xf32>
    %c0_9 = arith.constant 0 : index
    %c0_10 = arith.constant 0 : index
    %12 = vector.load %arg5[%c0_9, %c0_10] : memref<1x32xf32, #tpu.memory_space<vmem>>, vector<1x32xf32>
    %13 = vector.broadcast %12 : vector<1x32xf32> to vector<88x32xf32>
    %14 = arith.addf %11, %13 : vector<88x32xf32>
    %15 = arith.truncf %14 : vector<88x32xf32> to vector<88x32xbf16>
    %c0_11 = arith.constant 0 : index
    %c0_12 = arith.constant 0 : index
    %16 = vector.load %arg6[%c0_11, %c0_12] : memref<88x32xbf16, #tpu.memory_space<vmem>>, vector<88x32xbf16>
    tpu.vector_store %arg6[%c0_11, %c0_12], %15 {strides = array<i32>} : memref<88x32xbf16, #tpu.memory_space<vmem>>, vector<88x32xbf16>,
    return
  }
  func.func @transform_0(%arg0: i32) -> (i32, i32) {
    %c0_i32 = arith.constant 0 : i32
    %c0_i32_0 = arith.constant 0 : i32
    return %arg0, %c0_i32 : i32, i32
  }
  func.func @transform_1(%arg0: i32) -> (i32, i32) {
    %c0_i32 = arith.constant 0 : i32
    %c0_i32_0 = arith.constant 0 : i32
    %c0_i32_1 = arith.constant 0 : i32
    return %c0_i32, %c0_i32_0 : i32, i32
  }
  func.func @transform_2(%arg0: i32) -> (i32, i32) {
    %c0_i32 = arith.constant 0 : i32
    %c0_i32_0 = arith.constant 0 : i32
    %c0_i32_1 = arith.constant 0 : i32
    return %c0_i32, %c0_i32_0 : i32, i32
  }
  func.func @transform_3(%arg0: i32) -> (i32, i32) {
    %c0_i32 = arith.constant 0 : i32
    %c0_i32_0 = arith.constant 0 : i32
    %c0_i32_1 = arith.constant 0 : i32
    return %c0_i32, %c0_i32_0 : i32, i32
  }
  func.func @transform_4(%arg0: i32) -> (i32, i32) {
    %c0_i32 = arith.constant 0 : i32
    %c0_i32_0 = arith.constant 0 : i32
    %c0_i32_1 = arith.constant 0 : i32
    return %c0_i32, %c0_i32_0 : i32, i32
  }
  func.func @transform_5(%arg0: i32) -> (i32, i32) {
    %c0_i32 = arith.constant 0 : i32
    %c0_i32_0 = arith.constant 0 : i32
    return %arg0, %c0_i32 : i32, i32
  }
}

</mosaic_0001>

<llo_original>
// kernel: tpu_custom_call.1
$region0: #{tpu_custom_call.1}
  #allocation0 [shape = 'u32[]', space=smem, size = 0x4, offset = 0x4, fixed_abs, tag = 'smem constant byte address 0x4 - core index']
  #allocation1 [shape = 'u32[144,128]{1,0:T(1,128)}', space=vmem, size = 0x12000, scoped, tag = 'internal scratch']
  %s0 = inlined_call_operand.vmem [shape: f32[88,16], index: 0, kind: input, shape index: {}]
  %s1 = inlined_call_operand.vmem [shape: bf16[16,32], index: 1, kind: input, shape index: {}]
  %s2 = inlined_call_operand.vmem [shape: f32[1,32], index: 2, kind: input, shape index: {}]
  %s3 = inlined_call_operand.vmem [shape: bf16[32,32], index: 3, kind: input, shape index: {}]
  %s4 = inlined_call_operand.vmem [shape: f32[1,32], index: 4, kind: input, shape index: {}]
  %s5 = inlined_call_operand.vmem [shape: bf16[88,32], index: 5, kind: output, shape index: {}]
  %s6 = sld [smem:[#allocation0]]
  $region30: #{tpu_custom_call.1} parent=0
    _
  %s8 = ssub.s32 1, %s6
  %s9 = scalar_select 0, %s8, %s6
  // Predicated region
  $region2: #{tpu_custom_call.1} parent=0 // pred_check
    _
  $region3: #{tpu_custom_call.1} parent=0 // pred_check_branch
    %11 = sbr.rel (0) target = $region5
  $region4: #{tpu_custom_call.1} parent=0 // pred_region
    _
  $region5: #{tpu_custom_call.1} parent=0 // pred_fallthru
    _
  // Predicated region
  $region6: #{tpu_custom_call.1} parent=0 // pred_check
    _
  $region7: #{tpu_custom_call.1} parent=0 // pred_check_branch
    %13 = sbr.rel (0) target = $region9
  $region8: #{tpu_custom_call.1} parent=0 // pred_region
    _
  $region9: #{tpu_custom_call.1} parent=0 // pred_fallthru
    _
  // Predicated region
  $region10: #{tpu_custom_call.1} parent=0 // pred_check
    _
  $region11: #{tpu_custom_call.1} parent=0 // pred_check_branch
    %15 = sbr.rel (0) target = $region13
  $region12: #{tpu_custom_call.1} parent=0 // pred_region
    _
  $region13: #{tpu_custom_call.1} parent=0 // pred_fallthru
    _
  // Predicated region
  $region14: #{tpu_custom_call.1} parent=0 // pred_check
    _
  $region15: #{tpu_custom_call.1} parent=0 // pred_check_branch
    %17 = sbr.rel (0) target = $region17
  $region16: #{tpu_custom_call.1} parent=0 // pred_region
    _
  $region17: #{tpu_custom_call.1} parent=0 // pred_fallthru
    _
  // Predicated region
  $region18: #{tpu_custom_call.1} parent=0 // pred_check
    _
  $region19: #{tpu_custom_call.1} parent=0 // pred_check_branch
    %19 = sbr.rel (0) target = $region21
  $region20: #{tpu_custom_call.1} parent=0 // pred_region
    _
  $region21: #{tpu_custom_call.1} parent=0 // pred_fallthru
    _
  %v21 = vld [vmem:[%s0] sm:$0xff]
  %v22 = vld [vmem:[%s0 + $0x8] sm:$0xff]
  %v23 = vld [vmem:[%s0 + $0x10] sm:$0xff]
  %v24 = vld [vmem:[%s0 + $0x18] sm:$0xff]
  %v25 = vld [vmem:[%s0 + $0x20] sm:$0xff]
  %v26 = vld [vmem:[%s0 + $0x28] sm:$0xff]
  %v27 = vld [vmem:[%s0 + $0x30] sm:$0xff]
  %v28 = vld [vmem:[%s0 + $0x38] sm:$0xff]
  %v29 = vld [vmem:[%s0 + $0x40] sm:$0xff]
  %v30 = vld [vmem:[%s0 + $0x48] sm:$0xff]
  %v31 = vld [vmem:[%s0 + $0x50] sm:$0xff]
  %v32 = vpack.c.bf16 %v22, %v21
  %v33 = vpack.c.bf16 %v24, %v23
  %v34 = vpack.c.bf16 %v26, %v25
  %v35 = vpack.c.bf16 %v28, %v27
  %v36 = vpack.c.bf16 %v30, %v29
  %v37 = vpack.c.bf16 %v31, %v31
  %v38 = vld [vmem:[%s1] sm:$0xf]
  %v39 = vld [vmem:[%s1 + $0x4] sm:$0xf]
  %v40 = vld [vmem:[%s2] sm:$0x1]
  %v42 = vlaneseq
  %v43 = vshrl.u32 %v42, 7
  %v44 = vsub.s32 0, %v43
  %v45 = vrot.slane %v40, %v44
  %v49 = vunpack.c.l.b16 %v38
  %v50 = vunpack.c.l.b16 %v39
  %v51 = vpack.c.b16 %v50, %v49
  %vm53 = vcmask 130048
  %v55 = vsel %vm53, %v32, 0
  %v58 = vsel %vm53, %v33, 0
  %v61 = vsel %vm53, %v34, 0
  %v64 = vsel %vm53, %v35, 0
  %v67 = vsel %vm53, %v36, 0
  %v70 = vsel %vm53, %v37, 0
  %72 = vmatprep.subr.bf16.mxu0 0
  %73 = vmatpush1.bf16.msra.mxu0 %v51
  %74 = vmatprep.subr.bf16.mxu0 0
  %75 = vmatpush1.bf16.msra.mxu0 0
  %76 = vmatprep.subr.bf16.mxu0 0
  %77 = vmatpush1.bf16.msra.mxu0 0
  %78 = vmatprep.subr.bf16.mxu0 0
  %79 = vmatpush1.bf16.msra.mxu0 0
  %80 = vmatprep.subr.bf16.mxu0 0
  %81 = vmatpush1.bf16.msra.mxu0 0
  %82 = vmatprep.subr.bf16.mxu0 0
  %83 = vmatpush1.bf16.msra.mxu0 0
  %84 = vmatprep.subr.bf16.mxu0 0
  %85 = vmatpush1.bf16.msra.mxu0 0
  %86 = vmatprep.subr.bf16.mxu0 0
  %87 = vmatpush1.bf16.msra.mxu0 0
  %88 = vmatprep.subr.bf16.mxu0 0
  %89 = vmatpush1.bf16.msra.mxu0 0
  %90 = vmatprep.subr.bf16.mxu0 0
  %91 = vmatpush1.bf16.msra.mxu0 0
  %92 = vmatprep.subr.bf16.mxu0 0
  %93 = vmatpush1.bf16.msra.mxu0 0
  %94 = vmatprep.subr.bf16.mxu0 0
  %95 = vmatpush1.bf16.msra.mxu0 0
  %96 = vmatprep.subr.bf16.mxu0 0
  %97 = vmatpush1.bf16.msra.mxu0 0
  %98 = vmatprep.subr.bf16.mxu0 0
  %99 = vmatpush1.bf16.msra.mxu0 0
  %100 = vmatprep.subr.bf16.mxu0 0
  %101 = vmatpush1.bf16.msra.mxu0 0
  %102 = vmatprep.subr.bf16.mxu0 0
  %103 = vmatpush1.bf16.msra.mxu0 0
  %104 = vmatprep.mubr.bf16.mxu0 0
  %105 = vmatmul.mubr.bf16.gmra.mrb[0].mxu0 %v55
  %v106 = vpop.f32.mrb[0].mxu0
  %v107 = vadd.f32 %v45, %v106
  %v108 = vpop.f32.mrb[0].mxu0
  %v109 = vpop.f32.mrb[0].mxu0
  %v110 = vadd.f32 %v45, %v109
  %v111 = vpop.f32.mrb[0].mxu0
  %112 = vmatprep.mubr.bf16.mxu0 0
  %113 = vmatmul.mubr.bf16.gmra.mrb[0].mxu0 %v58
  %v114 = vpop.f32.mrb[0].mxu0
  %v115 = vadd.f32 %v45, %v114
  %v116 = vpop.f32.mrb[0].mxu0
  %v117 = vpop.f32.mrb[0].mxu0
  %v118 = vadd.f32 %v45, %v117
  %v119 = vpop.f32.mrb[0].mxu0
  %120 = vmatprep.mubr.bf16.mxu0 0
  %121 = vmatmul.mubr.bf16.gmra.mrb[0].mxu0 %v61
  %v122 = vpop.f32.mrb[0].mxu0
  %v123 = vadd.f32 %v45, %v122
  %v124 = vpop.f32.mrb[0].mxu0
  %v125 = vpop.f32.mrb[0].mxu0
  %v126 = vadd.f32 %v45, %v125
  %v127 = vpop.f32.mrb[0].mxu0
  %128 = vmatprep.mubr.bf16.mxu0 0
  %129 = vmatmul.mubr.bf16.gmra.mrb[0].mxu0 %v64
  %v130 = vpop.f32.mrb[0].mxu0
  %v131 = vadd.f32 %v45, %v130
  %v132 = vpop.f32.mrb[0].mxu0
  %v133 = vpop.f32.mrb[0].mxu0
  %v134 = vadd.f32 %v45, %v133
  %v135 = vpop.f32.mrb[0].mxu0
  %136 = vmatprep.mubr.bf16.mxu0 0
  %137 = vmatmul.mubr.bf16.gmra.mrb[0].mxu0 %v67
  %v138 = vpop.f32.mrb[0].mxu0
  %v139 = vadd.f32 %v45, %v138
  %v140 = vpop.f32.mrb[0].mxu0
  %v141 = vpop.f32.mrb[0].mxu0
  %v142 = vadd.f32 %v45, %v141
  %v143 = vpop.f32.mrb[0].mxu0
  %144 = vmatprep.mubr.bf16.mxu0 0
  %145 = vmatmul.mubr.bf16.gmra.mrb[0].mxu0 %v70
  %v146 = vpop.f32.mrb[0].mxu0
  %v147 = vadd.f32 %v45, %v146
  %v148 = vpop.f32.mrb[0].mxu0
  %v149 = vpop.f32.mrb[0].mxu0
  %v150 = vpop.f32.mrb[0].mxu0
  %151 = vdwg.mxu0
  %v152 = vmax.f32 %v107, 0.0
  %v153 = vmax.f32 %v110, 0.0
  %v154 = vmax.f32 %v115, 0.0
  %v155 = vmax.f32 %v118, 0.0
  %v156 = vmax.f32 %v123, 0.0
  %v157 = vmax.f32 %v126, 0.0
  %v158 = vmax.f32 %v131, 0.0
  %v159 = vmax.f32 %v134, 0.0
  %v160 = vmax.f32 %v139, 0.0
  %v161 = vmax.f32 %v142, 0.0
  %v162 = vmax.f32 %v147, 0.0
  %v163 = vpack.c.bf16 %v153, %v152
  %v164 = vpack.c.bf16 %v155, %v154
  %v165 = vpack.c.bf16 %v157, %v156
  %v166 = vpack.c.bf16 %v159, %v158
  %v167 = vpack.c.bf16 %v161, %v160
  %v168 = vpack.c.bf16 %v162, %v162
  %v169 = vld [vmem:[%s3] sm:$0xf]
  %v170 = vld [vmem:[%s3 + $0x4] sm:$0xf]
  %v171 = vld [vmem:[%s3 + $0x8] sm:$0xf]
  %v172 = vld [vmem:[%s3 + $0xc] sm:$0xf]
  %v173 = vld [vmem:[%s4] sm:$0x1]
  %v175 = vlaneseq
  %v176 = vshrl.u32 %v175, 7
  %v177 = vsub.s32 0, %v176
  %v178 = vrot.slane %v173, %v177
  %v184 = vunpack.c.l.b16 %v169
  %v185 = vunpack.c.l.b16 %v170
  %v186 = vunpack.c.l.b16 %v171
  %v187 = vunpack.c.l.b16 %v172
  %v188 = vpack.c.b16 %v185, %v184
  %v189 = vpack.c.b16 %v187, %v186
  %vm192 = vcmask 261120
  %v194 = vsel %vm192, %v163, 0
  %v197 = vsel %vm192, %v164, 0
  %v200 = vsel %vm192, %v165, 0
  %v203 = vsel %vm192, %v166, 0
  %v206 = vsel %vm192, %v167, 0
  %v209 = vsel %vm192, %v168, 0
  %211 = vmatprep.subr.bf16.mxu0 0
  %212 = vmatpush1.bf16.msra.mxu0 %v188
  %213 = vmatprep.subr.bf16.mxu0 0
  %214 = vmatpush1.bf16.msra.mxu0 %v189
  %215 = vmatprep.subr.bf16.mxu0 0
  %216 = vmatpush1.bf16.msra.mxu0 0
  %217 = vmatprep.subr.bf16.mxu0 0
  %218 = vmatpush1.bf16.msra.mxu0 0
  %219 = vmatprep.subr.bf16.mxu0 0
  %220 = vmatpush1.bf16.msra.mxu0 0
  %221 = vmatprep.subr.bf16.mxu0 0
  %222 = vmatpush1.bf16.msra.mxu0 0
  %223 = vmatprep.subr.bf16.mxu0 0
  %224 = vmatpush1.bf16.msra.mxu0 0
  %225 = vmatprep.subr.bf16.mxu0 0
  %226 = vmatpush1.bf16.msra.mxu0 0
  %227 = vmatprep.subr.bf16.mxu0 0
  %228 = vmatpush1.bf16.msra.mxu0 0
  %229 = vmatprep.subr.bf16.mxu0 0
  %230 = vmatpush1.bf16.msra.mxu0 0
  %231 = vmatprep.subr.bf16.mxu0 0
  %232 = vmatpush1.bf16.msra.mxu0 0
  %233 = vmatprep.subr.bf16.mxu0 0
  %234 = vmatpush1.bf16.msra.mxu0 0
  %235 = vmatprep.subr.bf16.mxu0 0
  %236 = vmatpush1.bf16.msra.mxu0 0
  %237 = vmatprep.subr.bf16.mxu0 0
  %238 = vmatpush1.bf16.msra.mxu0 0
  %239 = vmatprep.subr.bf16.mxu0 0
  %240 = vmatpush1.bf16.msra.mxu0 0
  %241 = vmatprep.subr.bf16.mxu0 0
  %242 = vmatpush1.bf16.msra.mxu0 0
  %243 = vmatprep.mubr.bf16.mxu0 0
  %244 = vmatmul.mubr.bf16.gmra.mrb[0].mxu0 %v194
  %v245 = vpop.f32.mrb[0].mxu0
  %v246 = vadd.f32 %v178, %v245
  %v247 = vpop.f32.mrb[0].mxu0
  %v248 = vpop.f32.mrb[0].mxu0
  %v249 = vadd.f32 %v178, %v248
  %v250 = vpop.f32.mrb[0].mxu0
  %251 = vmatprep.mubr.bf16.mxu0 0
  %252 = vmatmul.mubr.bf16.gmra.mrb[0].mxu0 %v197
  %v253 = vpop.f32.mrb[0].mxu0
  %v254 = vadd.f32 %v178, %v253
  %v255 = vpop.f32.mrb[0].mxu0
  %v256 = vpop.f32.mrb[0].mxu0
  %v257 = vadd.f32 %v178, %v256
  %v258 = vpop.f32.mrb[0].mxu0
  %259 = vmatprep.mubr.bf16.mxu0 0
  %260 = vmatmul.mubr.bf16.gmra.mrb[0].mxu0 %v200
  %v261 = vpop.f32.mrb[0].mxu0
  %v262 = vadd.f32 %v178, %v261
  %v263 = vpop.f32.mrb[0].mxu0
  %v264 = vpop.f32.mrb[0].mxu0
  %v265 = vadd.f32 %v178, %v264
  %v266 = vpop.f32.mrb[0].mxu0
  %267 = vmatprep.mubr.bf16.mxu0 0
  %268 = vmatmul.mubr.bf16.gmra.mrb[0].mxu0 %v203
  %v269 = vpop.f32.mrb[0].mxu0
  %v270 = vadd.f32 %v178, %v269
  %v271 = vpop.f32.mrb[0].mxu0
  %v272 = vpop.f32.mrb[0].mxu0
  %v273 = vadd.f32 %v178, %v272
  %v274 = vpop.f32.mrb[0].mxu0
  %275 = vmatprep.mubr.bf16.mxu0 0
  %276 = vmatmul.mubr.bf16.gmra.mrb[0].mxu0 %v206
  %v277 = vpop.f32.mrb[0].mxu0
  %v278 = vadd.f32 %v178, %v277
  %v279 = vpop.f32.mrb[0].mxu0
  %v280 = vpop.f32.mrb[0].mxu0
  %v281 = vadd.f32 %v178, %v280
  %v282 = vpop.f32.mrb[0].mxu0
  %283 = vmatprep.mubr.bf16.mxu0 0
  %284 = vmatmul.mubr.bf16.gmra.mrb[0].mxu0 %v209
  %v285 = vpop.f32.mrb[0].mxu0
  %v286 = vadd.f32 %v178, %v285
  %v287 = vpop.f32.mrb[0].mxu0
  %v288 = vpop.f32.mrb[0].mxu0
  %v289 = vpop.f32.mrb[0].mxu0
  %290 = vdwg.mxu0
  %v291 = vpack.c.bf16 %v249, %v246
  %v292 = vpack.c.bf16 %v257, %v254
  %v293 = vpack.c.bf16 %v265, %v262
  %v294 = vpack.c.bf16 %v273, %v270
  %v295 = vpack.c.bf16 %v281, %v278
  %v296 = vpack.c.bf16 %v286, %v286
  %v303 = vunpack.c.l.b16 %v291
  %v304 = vunpack.c.h.b16 %v291
  %v305 = vunpack.c.l.b16 %v292
  %v306 = vunpack.c.h.b16 %v292
  %v307 = vunpack.c.l.b16 %v293
  %v308 = vunpack.c.h.b16 %v293
  %v309 = vunpack.c.l.b16 %v294
  %v310 = vunpack.c.h.b16 %v294
  %v311 = vunpack.c.l.b16 %v295
  %v312 = vunpack.c.h.b16 %v295
  %v313 = vunpack.c.l.b16 %v296
  %v314 = vpack.c.b16 %v303, %v303
  %v315 = vpack.c.b16 %v304, %v304
  %v316 = vpack.c.b16 %v305, %v305
  %v317 = vpack.c.b16 %v306, %v306
  %v318 = vpack.c.b16 %v307, %v307
  %v319 = vpack.c.b16 %v308, %v308
  %v320 = vpack.c.b16 %v309, %v309
  %v321 = vpack.c.b16 %v310, %v310
  %v322 = vpack.c.b16 %v311, %v311
  %v323 = vpack.c.b16 %v312, %v312
  %v324 = vpack.c.b16 %v313, %v313
  %vm336 = vcmask 257024
  %337 = vst.msk [vmem:[%s5] sm:$0xf] %vm336, %v314
  %338 = vst.msk [vmem:[%s5 + $0x4] sm:$0xf] %vm336, %v315
  %339 = vst.msk [vmem:[%s5 + $0x8] sm:$0xf] %vm336, %v316
  %340 = vst.msk [vmem:[%s5 + $0xc] sm:$0xf] %vm336, %v317
  %341 = vst.msk [vmem:[%s5 + $0x10] sm:$0xf] %vm336, %v318
  %342 = vst.msk [vmem:[%s5 + $0x14] sm:$0xf] %vm336, %v319
  %343 = vst.msk [vmem:[%s5 + $0x18] sm:$0xf] %vm336, %v320
  %344 = vst.msk [vmem:[%s5 + $0x1c] sm:$0xf] %vm336, %v321
  %345 = vst.msk [vmem:[%s5 + $0x20] sm:$0xf] %vm336, %v322
  %346 = vst.msk [vmem:[%s5 + $0x24] sm:$0xf] %vm336, %v323
  %347 = vst.msk [vmem:[%s5 + $0x28] sm:$0xf] %vm336, %v324
  // Predicated region
  $region22: #{tpu_custom_call.1} parent=0 // pred_check
    _
  $region23: #{tpu_custom_call.1} parent=0 // pred_check_branch
    %349 = sbr.rel (0) target = $region25
  $region24: #{tpu_custom_call.1} parent=0 // pred_region
    _
  $region25: #{tpu_custom_call.1} parent=0 // pred_fallthru
    _
  // Predicated region
  $region26: #{tpu_custom_call.1} parent=0 // pred_check
    _
  $region27: #{tpu_custom_call.1} parent=0 // pred_check_branch
    %351 = sbr.rel (0) target = $region29
  $region28: #{tpu_custom_call.1} parent=0 // pred_region
    _
  $region29: #{tpu_custom_call.1} parent=0 // pred_fallthru
    _

</llo_original>
